<compile_context>
chip_gen: v7x
topology: tpu7x:2x2x1
jax: 0.10.0
libtpu: 0.0.40
codegen_flags: <defaults>
</compile_context>

<pallas_src>
import functools

import jax
import jax.numpy as jnp
from jax import lax
from jax.experimental import pallas as pl
from jax.experimental.pallas import tpu as pltpu

# ----------------------------- "opt" configuration -----------------------------
ID_EMB_SIZE = 32
NUM_FEA = 2
FEATURE_DIM = ID_EMB_SIZE * NUM_FEA * 2   # cat + cat -> 128
DOC_LEN = 128
USER_NUM = 64
ITEM_NUM = 64
LAMBDA1 = 0.5
DROP_OUT = 0.0                # eval stage -> nn.Dropout is identity
TB = 1024                     # max batch tile (review: 512-1024 ~85% of HBM roofline)
MATMUL_DTYPE = jnp.bfloat16   # doc-stream dtype; f32 for exact matching, fp8 option on v7x


# ----------------------------- Pallas kernel -----------------------------------
def vader_kernel(w_ref, u_doc_ref, i_doc_ref, bias_ref, out_ref, *, lambda1):
    # Dots contract the last (lane) dim of both operands (A @ B.T), so the batch axis of
    # the docs lands on the OUTPUT lane axis -> lane-dense (1, tb) results, unmasked vst.
    dn = (((1,), (1,)), ((), ()))

    # w_ref rows: 0 = fused user-doc weight, 1 = fused item-doc weight,
    #             2 = one-hot selector for item_doc[:, -1]; 3..7 = zero padding.
    cu = lax.dot_general(w_ref[0:1, :], u_doc_ref[...], dn,
                         preferred_element_type=jnp.float32)        # (1, tb)
    ci = lax.dot_general(w_ref[1:3, :], i_doc_ref[...], dn,
                         preferred_element_type=jnp.float32)        # (2, tb)

    # LFM: fused fc + fc_b + id-embedding projections + user/item biases, all pre-folded
    # into the merged lane-dense bias row.  Epilogue stays in f32 (v5e has no bf16 VPU/EUP).
    out = cu + ci[0:1, :] + bias_ref[0]                             # (1, tb)

    # Eval-stage popularity adjustment: i_c = item_doc[:, -1] (lane-dense via one-hot row).
    i_c = ci[1:2, :]
    out_ref[0] = out + out * lambda1 * jnp.tanh(i_c)


# ----------------------------- host-side weight fusion ---------------------------
def fuse_params(params):
    """One-time (load-time) algebraic fusion of fc / id-embeddings into small tables."""
    E = ID_EMB_SIZE
    w_fc = params["w_fc"][:, 0]                                     # (4E,)

    # fc folded into the doc projections:  doc @ (W_doc @ w_fc_slice)
    w_u = params["w_udoc"] @ w_fc[E:2 * E]                          # (DOC_LEN,)
    w_i = params["w_idoc"] @ w_fc[3 * E:4 * E]                      # (DOC_LEN,)
    e_last = jnp.zeros((DOC_LEN,), jnp.float32).at[DOC_LEN - 1].set(1.0)
    w_stack = (jnp.zeros((8, DOC_LEN), jnp.float32)                 # one full sublane tile
               .at[0].set(w_u).at[1].set(w_i).at[2].set(e_last))

    # id-embedding contribution + user/item bias + fc_b folded into per-row scalar tables.
    u_bias = params["b_users"][:, 0] + params["uid_emb"] @ w_fc[0:E] + params["fc_b"]
    i_bias = params["b_items"][:, 0] + params["iid_emb"] @ w_fc[2 * E:3 * E]

    return {"w": w_stack.astype(MATMUL_DTYPE),
            "u_bias": u_bias.astype(jnp.float32),                   # (USER_NUM,)
            "i_bias": i_bias.astype(jnp.float32)}                   # (ITEM_NUM,)


# ----------------------------- wrapper ------------------------------------------
def model_vader_forward(fused, uids, iids, user_doc, item_doc, *, tb_max=TB):
    batch = user_doc.shape[0]

    if batch <= tb_max:
        tb, num_tiles = batch, 1         # single full-batch block (no (8,128) constraint)
    else:
        assert tb_max % 8 == 0, "tb_max must be a multiple of 8"
        tb = tb_max
        num_tiles = pl.cdiv(batch, tb)   # ragged last tile handled by dropping OOB lanes
    # On v7x size tb_max so that num_tiles >= 2 and both TensorCores get batch tiles.

    # Scalar glue: a single (B,) gather-add (id projections/biases/fc_b pre-folded).
    # TODO(synk): at production batch sizes this gather could move in-kernel via
    # PrefetchScalarGridSpec + pl.Element row gathers on the bias tables.
    bias = fused["u_bias"][uids] + fused["i_bias"][iids]            # (B,) f32
    padded = num_tiles * tb
    if padded != batch:
        bias = jnp.pad(bias, (0, padded - batch))   # pad ONLY the tiny bias; docs unpadded
    bias = bias.reshape(num_tiles, 1, tb)           # lane-dense per-tile rows

    user_doc = user_doc.astype(MATMUL_DTYPE)        # no-op when already stored in bf16
    item_doc = item_doc.astype(MATMUL_DTYPE)

    kernel = functools.partial(vader_kernel, lambda1=LAMBDA1)

    out = pl.pallas_call(
        kernel,
        out_shape=jax.ShapeDtypeStruct((num_tiles, 1, tb), jnp.float32),
        grid=(num_tiles,),
        in_specs=[
            pl.BlockSpec((8, DOC_LEN), lambda b: (0, 0)),           # fused weight rows
            pl.BlockSpec((tb, DOC_LEN), lambda b: (b, 0)),          # user_doc tile
            pl.BlockSpec((tb, DOC_LEN), lambda b: (b, 0)),          # item_doc tile
            pl.BlockSpec((1, 1, tb), lambda b: (b, 0, 0)),          # merged bias (lane-dense)
        ],
        out_specs=pl.BlockSpec((1, 1, tb), lambda b: (b, 0, 0)),
        compiler_params=pltpu.CompilerParams(
            dimension_semantics=("parallel",)),
    )(fused["w"], user_doc, item_doc, bias)

    return out.reshape(padded)[:batch]               # matches torch .squeeze(1)


# ----------------------------- pure-JAX reference --------------------------------
def reference_forward(params, uids, iids, user_doc, item_doc):
    u_id = params["uid_emb"][uids]
    i_id = params["iid_emb"][iids]
    u_proj = user_doc @ params["w_udoc"]
    i_proj = item_doc @ params["w_idoc"]
    user_feature = jnp.stack([u_id, u_proj], axis=1)    # (B, num_fea, E)
    item_feature = jnp.stack([i_id, i_proj], axis=1)
    u_out = user_feature.reshape(user_feature.shape[0], -1)
    i_out = item_feature.reshape(item_feature.shape[0], -1)
    feat = jnp.concatenate([u_out, i_out], axis=1)       # (B, FEATURE_DIM)
    fm = feat @ params["w_fc"] + params["fc_b"]
    out = (fm + params["b_users"][uids] + params["b_items"][iids]).squeeze(1)
    i_c = item_doc[:, -1]
    return out + out * LAMBDA1 * jnp.tanh(i_c)


# ----------------------------- main ----------------------------------------------
if __name__ == "__main__":
    key = jax.random.PRNGKey(0)
    ks = jax.random.split(key, 12)

    params = {
        "uid_emb": jax.random.normal(ks[0], (USER_NUM, ID_EMB_SIZE), jnp.float32) * 0.1,
        "iid_emb": jax.random.normal(ks[1], (ITEM_NUM, ID_EMB_SIZE), jnp.float32) * 0.1,
        "w_udoc":  jax.random.normal(ks[2], (DOC_LEN, ID_EMB_SIZE), jnp.float32) * 0.05,
        "w_idoc":  jax.random.normal(ks[3], (DOC_LEN, ID_EMB_SIZE), jnp.float32) * 0.05,
        "w_fc":    jax.random.normal(ks[4], (FEATURE_DIM, 1), jnp.float32) * 0.05,
        "fc_b":    jax.random.normal(ks[5], (), jnp.float32) * 0.01,
        "b_users": jax.random.normal(ks[6], (USER_NUM, 1), jnp.float32) * 0.1,
        "b_items": jax.random.normal(ks[7], (ITEM_NUM, 1), jnp.float32) * 0.1,
    }

    fused = fuse_params(params)           # one-time, load-time fusion

    def run_case(batch, tb_max, k0):
        kk = jax.random.split(k0, 4)
        uids = jax.random.randint(kk[0], (batch,), 0, USER_NUM)
        iids = jax.random.randint(kk[1], (batch,), 0, ITEM_NUM)
        # In the original framework user_doc/item_doc are word-id sequences consumed by
        # the injected Net; here they are synthetic float document features, stored in
        # MATMUL_DTYPE (bf16) as they would be at serving time.
        user_doc = jax.random.normal(kk[2], (batch, DOC_LEN), jnp.float32)
        item_doc = jax.random.normal(kk[3], (batch, DOC_LEN), jnp.float32)

        out = model_vader_forward(fused, uids, iids,
                                  user_doc.astype(MATMUL_DTYPE),
                                  item_doc.astype(MATMUL_DTYPE),
                                  tb_max=tb_max)
        out = jax.block_until_ready(out)

        ref = reference_forward(params, uids, iids, user_doc, item_doc)
        assert out.shape == (batch,)
        # bf16 doc streams -> loosened tolerance (f32 MATMUL_DTYPE matches at 1e-4).
        assert jnp.allclose(out, ref, atol=2e-2, rtol=2e-2), (batch, out, ref)

    run_case(8, TB, ks[8])      # small batch: single full-batch block, no padding
    run_case(24, 8, ks[9])      # multi-tile grid path (3 exact batch tiles)
    run_case(13, 8, ks[10])     # ragged last tile: docs unpadded, OOB lanes dropped

    # TODO(synk): train-stage 'trans-PDA' branch uses pandas fillna on c**lambda2 and
    # stochastic nn.Dropout; eval-stage semantics are implemented here instead.
    print("KERNEL_OK")
</pallas_src>

<mosaic_0001>
module attributes {stable_mosaic.version = 11 : i64} {
  func.func @vader_kernel(%arg0: i32, %arg1: memref<8x128xbf16, #tpu.memory_space<vmem>>, %arg2: memref<8x128xbf16, #tpu.memory_space<vmem>>, %arg3: memref<8x128xbf16, #tpu.memory_space<vmem>>, %arg4: memref<1x1x8xf32, #tpu.memory_space<vmem>>, %arg5: memref<1x1x8xf32, #tpu.memory_space<vmem>>) attributes {dimension_semantics = [#tpu.dimension_semantics<parallel>], iteration_bounds = array<i64: 1>, scalar_prefetch = 0 : i64, scratch_operands = 0 : i64, tpu.core_type = #tpu.core_type<tc>, window_params = [{pipeline_mode = #tpu.pipeline_mode<synchronous>, transform_indices = @transform_0, window_bounds = array<i64: 8, 128>}, {transform_indices = @transform_1, window_bounds = array<i64: 8, 128>}, {transform_indices = @transform_2, window_bounds = array<i64: 8, 128>}, {transform_indices = @transform_3, window_bounds = array<i64: 1, 1, 8>}, {transform_indices = @transform_4, window_bounds = array<i64: 1, 1, 8>}]} {
    %c0 = arith.constant 0 : index
    %c0_0 = arith.constant 0 : index
    %0 = vector.load %arg1[%c0, %c0_0] : memref<8x128xbf16, #tpu.memory_space<vmem>>, vector<1x128xbf16>
    %c0_1 = arith.constant 0 : index
    %c0_2 = arith.constant 0 : index
    %1 = vector.load %arg2[%c0_1, %c0_2] : memref<8x128xbf16, #tpu.memory_space<vmem>>, vector<8x128xbf16>
    %cst = arith.constant dense<0.000000e+00> : vector<1x8xf32>
    %2 = tpu.matmul %0, %1, %cst {dimension_numbers = #tpu.dot_dimension_numbers<[1], [1], [0], [0], [0, 0, 1, 0], [], []>} : vector<1x128xbf16>, vector<8x128xbf16>, vector<1x8xf32> -> vector<1x8xf32>
    %c1 = arith.constant 1 : index
    %c0_3 = arith.constant 0 : index
    %3 = vector.load %arg1[%c1, %c0_3] : memref<8x128xbf16, #tpu.memory_space<vmem>>, vector<2x128xbf16>
    %c0_4 = arith.constant 0 : index
    %c0_5 = arith.constant 0 : index
    %4 = vector.load %arg3[%c0_4, %c0_5] : memref<8x128xbf16, #tpu.memory_space<vmem>>, vector<8x128xbf16>
    %cst_6 = arith.constant dense<0.000000e+00> : vector<2x8xf32>
    %5 = tpu.matmul %3, %4, %cst_6 {dimension_numbers = #tpu.dot_dimension_numbers<[1], [1], [0], [0], [0, 0, 1, 0], [], []>} : vector<2x128xbf16>, vector<8x128xbf16>, vector<2x8xf32> -> vector<2x8xf32>
    %6 = vector.extract_strided_slice %5 {offsets = [0, 0], sizes = [1, 8], strides = [1, 1]} : vector<2x8xf32> to vector<1x8xf32>
    %7 = arith.addf %2, %6 : vector<1x8xf32>
    %c0_7 = arith.constant 0 : index
    %c0_8 = arith.constant 0 : index
    %c0_9 = arith.constant 0 : index
    %8 = vector.load %arg4[%c0_7, %c0_8, %c0_9] : memref<1x1x8xf32, #tpu.memory_space<vmem>>, vector<1x1x8xf32>
    %9 = vector.shape_cast %8 : vector<1x1x8xf32> to vector<1x8xf32>
    %10 = arith.addf %7, %9 : vector<1x8xf32>
    %11 = vector.extract_strided_slice %5 {offsets = [1, 0], sizes = [1, 8], strides = [1, 1]} : vector<2x8xf32> to vector<1x8xf32>
    %cst_10 = arith.constant 5.000000e-01 : f32
    %12 = vector.broadcast %cst_10 : f32 to vector<1x8xf32>
    %13 = arith.mulf %10, %12 : vector<1x8xf32>
    %14 = math.tanh %11 : vector<1x8xf32>
    %15 = arith.mulf %13, %14 : vector<1x8xf32>
    %16 = arith.addf %10, %15 : vector<1x8xf32>
    %c0_11 = arith.constant 0 : index
    %c0_12 = arith.constant 0 : index
    %c0_13 = arith.constant 0 : index
    %17 = vector.load %arg5[%c0_11, %c0_12, %c0_13] : memref<1x1x8xf32, #tpu.memory_space<vmem>>, vector<1x1x8xf32>
    %18 = vector.shape_cast %17 : vector<1x1x8xf32> to vector<1x8xf32>
    %19 = vector.shape_cast %16 : vector<1x8xf32> to vector<1x1x8xf32>
    tpu.vector_store %arg5[%c0_11, %c0_12, %c0_13], %19 {strides = array<i32>} : memref<1x1x8xf32, #tpu.memory_space<vmem>>, vector<1x1x8xf32>,
    return
  }
  func.func @transform_0(%arg0: i32) -> (i32, i32) {
    %c0_i32 = arith.constant 0 : i32
    %c0_i32_0 = arith.constant 0 : i32
    %c0_i32_1 = arith.constant 0 : i32
    return %c0_i32, %c0_i32_0 : i32, i32
  }
  func.func @transform_1(%arg0: i32) -> (i32, i32) {
    %c0_i32 = arith.constant 0 : i32
    %c0_i32_0 = arith.constant 0 : i32
    return %arg0, %c0_i32 : i32, i32
  }
  func.func @transform_2(%arg0: i32) -> (i32, i32) {
    %c0_i32 = arith.constant 0 : i32
    %c0_i32_0 = arith.constant 0 : i32
    return %arg0, %c0_i32 : i32, i32
  }
  func.func @transform_3(%arg0: i32) -> (i32, i32, i32) {
    %c0_i32 = arith.constant 0 : i32
    %c0_i32_0 = arith.constant 0 : i32
    %c0_i32_1 = arith.constant 0 : i32
    return %arg0, %c0_i32, %c0_i32_0 : i32, i32, i32
  }
  func.func @transform_4(%arg0: i32) -> (i32, i32, i32) {
    %c0_i32 = arith.constant 0 : i32
    %c0_i32_0 = arith.constant 0 : i32
    %c0_i32_1 = arith.constant 0 : i32
    return %arg0, %c0_i32, %c0_i32_0 : i32, i32, i32
  }
}

</mosaic_0001>

<llo_original>
// kernel: tpu_custom_call.1
$region0: #{tpu_custom_call.1}
  #allocation0 [shape = 'u32[]', space=smem, size = 0x4, offset = 0x4, fixed_abs, tag = 'smem constant byte address 0x4 - core index']
  #allocation1 [shape = 'u32[144,128]{1,0:T(1,128)}', space=vmem, size = 0x12000, scoped, tag = 'internal scratch']
  %s0 = inlined_call_operand.hbm [shape: bf16[8,128], index: 0, kind: input, shape index: {}]
  %s1 = inlined_call_operand.hbm [shape: bf16[8,128], index: 1, kind: input, shape index: {}]
  %s2 = inlined_call_operand.vmem [shape: bf16[8,128], index: 2, kind: input, shape index: {}]
  %s3 = inlined_call_operand.vmem [shape: f32[1,1,8], index: 3, kind: input, shape index: {}]
  %s4 = inlined_call_operand.hbm [shape: f32[1,1,8], index: 4, kind: output, shape index: {}]
  %s5 = sld [smem:[#allocation0]]
  $region34: #{tpu_custom_call.1} parent=0
    _
  %s7 = ssub.s32 1, %s5
  %s8 = scalar_select 0, %s7, %s5
  $region1: #{tpu_custom_call.1} parent=0
    #allocation2 [shape = 'u8[2048]{0}', space=vmem, size = 0x800, scoped, tag = 'input window, operand 0, single buffered']
    #allocation3 [shape = 's32[1]{0}', space=sflag, size = 0x4, scoped, tag = 'scoped memory for tpu_custom_call.1']
    #allocation4 [shape = 's32[1]{0}', space=sflag, size = 0x4, scoped, tag = 'scoped memory for tpu_custom_call.1']
    #allocation5 [shape = 'u8[2048]{0}', space=vmem, size = 0x800, scoped, tag = 'input window, operand 1, single buffered']
    #allocation6 [shape = 's32[1]{0}', space=sflag, size = 0x4, scoped, tag = 'scoped memory for tpu_custom_call.1']
    #allocation7 [shape = 'u8[512]{0}', space=vmem, size = 0x400, scoped, tag = 'output window, operand 0, single buffered']
    %9 = vsyncpa [#allocation3], 0
    %10 = vsyncpa [#allocation6], 0
    %11 = vsyncpa [#allocation4], 0
    // Predicated region
    $region2: #{tpu_custom_call.1} parent=1 // pred_check
      _
    $region3: #{tpu_custom_call.1} parent=1 // pred_check_branch
      %13 = sbr.rel (0) target = $region5
    $region4: #{tpu_custom_call.1} parent=1 // pred_region
      %s15 = ssub.s32 64, 64
      %16 = vsyncadd [#allocation3], %s15
      %s18 = sshll.u32 [#allocation2], 4
      %s19 = int_to_ptr.vmem [resolvable:$true] %s18
      %21 = dma.hbm_to_vmem [thread:$0]  %s0, 64, %s19, [#allocation3]
    $region5: #{tpu_custom_call.1} parent=1 // pred_fallthru
      _
    // Predicated region
    $region6: #{tpu_custom_call.1} parent=1 // pred_check
      _
    $region7: #{tpu_custom_call.1} parent=1 // pred_check_branch
      %23 = sbr.rel (0) target = $region9
    $region8: #{tpu_custom_call.1} parent=1 // pred_region
      %s25 = ssub.s32 64, 64
      %26 = vsyncadd [#allocation6], %s25
      %s28 = sshll.u32 [#allocation5], 4
      %s29 = int_to_ptr.vmem [resolvable:$true] %s28
      %31 = dma.hbm_to_vmem [thread:$0]  %s1, 64, %s29, [#allocation6]
    $region9: #{tpu_custom_call.1} parent=1 // pred_fallthru
      _
    // Predicated region
    $region10: #{tpu_custom_call.1} parent=1 // pred_check
      _
    $region11: #{tpu_custom_call.1} parent=1 // pred_check_branch
      %33 = sbr.rel (0) target = $region13
    $region12: #{tpu_custom_call.1} parent=1 // pred_region
      _
    $region13: #{tpu_custom_call.1} parent=1 // pred_fallthru
      _
    // Predicated region
    $region14: #{tpu_custom_call.1} parent=1 // pred_check
      _
    $region15: #{tpu_custom_call.1} parent=1 // pred_check_branch
      %35 = sbr.rel (0) target = $region17
    $region16: #{tpu_custom_call.1} parent=1 // pred_region
      _
    $region17: #{tpu_custom_call.1} parent=1 // pred_fallthru
      _
    // Predicated region
    $region18: #{tpu_custom_call.1} parent=1 // pred_check
      _
    $region19: #{tpu_custom_call.1} parent=1 // pred_check_branch
      %37 = sbr.rel (0) target = $region21
    $region20: #{tpu_custom_call.1} parent=1 // pred_region
      %38 = dma.done [#allocation3], 64
    $region21: #{tpu_custom_call.1} parent=1 // pred_fallthru
      _
    // Predicated region
    $region22: #{tpu_custom_call.1} parent=1 // pred_check
      _
    $region23: #{tpu_custom_call.1} parent=1 // pred_check_branch
      %40 = sbr.rel (0) target = $region25
    $region24: #{tpu_custom_call.1} parent=1 // pred_region
      %41 = dma.done [#allocation6], 64
    $region25: #{tpu_custom_call.1} parent=1 // pred_fallthru
      _
    %v43 = vld [vmem:[#allocation2] sm:$0x1]
    %v44 = vld [vmem:[#allocation5] sm:$0xf]
    %v45 = vld [vmem:[#allocation2] sm:$0x3]
    %v46 = vld [vmem:[%s2] sm:$0xf]
    %v48 = vunpack.c.l.b16 %v45
    %v49 = vpack.c.b16 %v48, %v48
    %v51 = vshrl.u32 %v49, 16
    %v53 = vshll.u32 %v49, 16
    %v55 = vrot.slane %v53, 1
    %v56 = vor.u32 %v51, %v55
    %58 = vmatprep.subr.bf16.mxu0 0
    %59 = vmatpush1.bf16.xpose.msra.mxu0 %v46
    %60 = vmatprep.subr.bf16.mxu0 0
    %61 = vmatpush1.bf16.xpose.msra.mxu0 0
    %62 = vmatprep.subr.bf16.mxu0 0
    %63 = vmatpush1.bf16.xpose.msra.mxu0 0
    %64 = vmatprep.subr.bf16.mxu0 0
    %65 = vmatpush1.bf16.xpose.msra.mxu0 0
    %66 = vmatprep.subr.bf16.mxu0 0
    %67 = vmatpush1.bf16.xpose.msra.mxu0 0
    %68 = vmatprep.subr.bf16.mxu0 0
    %69 = vmatpush1.bf16.xpose.msra.mxu0 0
    %70 = vmatprep.subr.bf16.mxu0 0
    %71 = vmatpush1.bf16.xpose.msra.mxu0 0
    %72 = vmatprep.subr.bf16.mxu0 0
    %73 = vmatpush1.bf16.xpose.msra.mxu0 0
    %74 = vmatprep.subr.bf16.mxu0 0
    %75 = vmatpush1.bf16.xpose.msra.mxu0 0
    %76 = vmatprep.subr.bf16.mxu0 0
    %77 = vmatpush1.bf16.xpose.msra.mxu0 0
    %78 = vmatprep.subr.bf16.mxu0 0
    %79 = vmatpush1.bf16.xpose.msra.mxu0 0
    %80 = vmatprep.subr.bf16.mxu0 0
    %81 = vmatpush1.bf16.xpose.msra.mxu0 0
    %82 = vmatprep.subr.bf16.mxu0 0
    %83 = vmatpush1.bf16.xpose.msra.mxu0 0
    %84 = vmatprep.subr.bf16.mxu0 0
    %85 = vmatpush1.bf16.xpose.msra.mxu0 0
    %86 = vmatprep.subr.bf16.mxu0 0
    %87 = vmatpush1.bf16.xpose.msra.mxu0 0
    %88 = vmatprep.subr.bf16.mxu0 0
    %89 = vmatpush1.bf16.xpose.msra.mxu0 0
    %90 = vmatprep.mubr.bf16.mxu0 0
    %91 = vmatmul.mubr.bf16.gmra.mrb[0].mxu0 %v56
    %v92 = vpop.f32.mrb[0].mxu0
    %v93 = vadd.f32 0.0, %v92
    %v94 = vpop.f32.mrb[0].mxu0
    %v95 = vpop.f32.mrb[0].mxu0
    %v96 = vpop.f32.mrb[0].mxu0
    %97 = vdwg.mxu0
    %98 = vmatprep.subr.bf16.mxu0 0
    %99 = vmatpush1.bf16.xpose.msra.mxu0 %v44
    %100 = vmatprep.subr.bf16.mxu0 0
    %101 = vmatpush1.bf16.xpose.msra.mxu0 0
    %102 = vmatprep.subr.bf16.mxu0 0
    %103 = vmatpush1.bf16.xpose.msra.mxu0 0
    %104 = vmatprep.subr.bf16.mxu0 0
    %105 = vmatpush1.bf16.xpose.msra.mxu0 0
    %106 = vmatprep.subr.bf16.mxu0 0
    %107 = vmatpush1.bf16.xpose.msra.mxu0 0
    %108 = vmatprep.subr.bf16.mxu0 0
    %109 = vmatpush1.bf16.xpose.msra.mxu0 0
    %110 = vmatprep.subr.bf16.mxu0 0
    %111 = vmatpush1.bf16.xpose.msra.mxu0 0
    %112 = vmatprep.subr.bf16.mxu0 0
    %113 = vmatpush1.bf16.xpose.msra.mxu0 0
    %114 = vmatprep.subr.bf16.mxu0 0
    %115 = vmatpush1.bf16.xpose.msra.mxu0 0
    %116 = vmatprep.subr.bf16.mxu0 0
    %117 = vmatpush1.bf16.xpose.msra.mxu0 0
    %118 = vmatprep.subr.bf16.mxu0 0
    %119 = vmatpush1.bf16.xpose.msra.mxu0 0
    %120 = vmatprep.subr.bf16.mxu0 0
    %121 = vmatpush1.bf16.xpose.msra.mxu0 0
    %122 = vmatprep.subr.bf16.mxu0 0
    %123 = vmatpush1.bf16.xpose.msra.mxu0 0
    %124 = vmatprep.subr.bf16.mxu0 0
    %125 = vmatpush1.bf16.xpose.msra.mxu0 0
    %126 = vmatprep.subr.bf16.mxu0 0
    %127 = vmatpush1.bf16.xpose.msra.mxu0 0
    %128 = vmatprep.subr.bf16.mxu0 0
    %129 = vmatpush1.bf16.xpose.msra.mxu0 0
    %130 = vmatprep.mubr.bf16.mxu0 0
    %131 = vmatmul.mubr.bf16.gmra.mrb[0].mxu0 %v43
    %v132 = vpop.f32.mrb[0].mxu0
    %v133 = vadd.f32 %v93, %v132
    %v134 = vpop.f32.mrb[0].mxu0
    %v135 = vpop.f32.mrb[0].mxu0
    %v136 = vpop.f32.mrb[0].mxu0
    %137 = vdwg.mxu0
    %v138 = vld [vmem:[%s3] sm:$0x1]
    %v139 = vadd.f32 %v133, %v138
    %v140 = vmul.f32 %v139, 0.5
    %v141 = vtanh.pop %v93
    %v143 = vrot.slane %v141, 1
    %v145 = vmul.f32 %v140, %v143
    %v146 = vadd.f32 %v139, %v145
    %vm147 = vcmask 57344
    %148 = vst.msk [vmem:[#allocation7] sm:$0x1] %vm147, %v146
    // Predicated region
    $region26: #{tpu_custom_call.1} parent=1 // pred_check
      _
    $region27: #{tpu_custom_call.1} parent=1 // pred_check_branch
      %150 = sbr.rel (0) target = $region29
    $region28: #{tpu_custom_call.1} parent=1 // pred_region
      %s152 = ssub.s32 16, 16
      %153 = vsyncadd [#allocation4], %s152
      %s155 = sshll.u32 [#allocation7], 4
      %s156 = int_to_ptr.vmem [resolvable:$true] %s155
      %158 = dma.vmem_to_hbm [thread:$0]  %s156, 16, %s4, [#allocation4]
    $region29: #{tpu_custom_call.1} parent=1 // pred_fallthru
      _
    // Predicated region
    $region30: #{tpu_custom_call.1} parent=1 // pred_check
      _
    $region31: #{tpu_custom_call.1} parent=1 // pred_check_branch
      %160 = sbr.rel (0) target = $region33
    $region32: #{tpu_custom_call.1} parent=1 // pred_region
      %161 = dma.done [#allocation4], 16
    $region33: #{tpu_custom_call.1} parent=1 // pred_fallthru
      _
    %162 = vsyncpa [#allocation3], 1
    %163 = vsyncpa [#allocation6], 1
    %164 = vsyncpa [#allocation4], 1

</llo_original>
